<compile_context>
chip_gen: v6e
topology: v6e:2x2x1
jax: 0.10.0
libtpu: 0.0.40
codegen_flags: <defaults>
</compile_context>

<pallas_src>
import math

import jax
import jax.numpy as jnp
from jax import lax
from jax.experimental import pallas as pl
from jax.experimental.pallas import tpu as pltpu

# ----- SimPLE hyperparameters (module __init__ defaults) ---------------------
B_THETA = 0.3
ALPHA = 0.0001
R = 1.0
M_MARGIN = 0.0
LW = 1000.0
INIT_BIAS = -10.0            # nn.Parameter init: init_bias + 0.0 * Tensor(1)
COS_B_THETA = math.cos(B_THETA)


# ----- Pallas kernel ----------------------------------------------------------
def _simple_kernel(bias_ref, pt_ref, x_ref, xb_ref, y_ref, yb_ref, o_ref, xn_ref):
    """Accumulates lane-dense partial sums into the resident output block.

    o_ref block: (1, 4, 8, TM) f32 planes:
      0: sum of softplus(-z) over mask_p          (positive-pair BCE numerator)
      1: count of mask_p                          (positive-pair count)
      2: sum of softplus(+z) over mask_n (= !eq)  (negative-pair BCE numerator)
      3: count of label-equal diagonal entries    (self pairs; used for count_neg)
    """
    i = pl.program_id(0)          # N-tile index   ("parallel")
    j = pl.program_id(1)          # bank-tile index ("arbitrary", accumulated)

    tn, d = x_ref.shape
    tm = xb_ref.shape[0]

    # ---- once per N-tile: normalize query block (f32, rsqrt) -> bf16 cache,
    #      and zero the resident accumulator planes.
    @pl.when(j == 0)
    def _init():
        xf = x_ref[...].astype(jnp.float32)
        ssq = jnp.sum(xf * xf, axis=-1, keepdims=True)
        xn_ref[...] = (xf * lax.rsqrt(jnp.maximum(ssq, 1e-24))).astype(jnp.bfloat16)
        o_ref[...] = jnp.zeros_like(o_ref)

    # ---- per bank tile: normalize (f32) -> bf16, cosine matmul on the MXU.
    xbf = xb_ref[...].astype(jnp.float32)
    bssq = jnp.sum(xbf * xbf, axis=-1, keepdims=True)
    xbn = (xbf * lax.rsqrt(jnp.maximum(bssq, 1e-24))).astype(jnp.bfloat16)

    # Contract the last dims of both operands: no explicit transpose of the bank tile.
    cos = lax.dot_general(xn_ref[...], xbn, (((1,), (1,)), ((), ())),
                          preferred_element_type=jnp.float32)          # (TN, TM)
    logits = cos - COS_B_THETA
    bias = bias_ref[0]

    if R == 1.0 and M_MARGIN == 0.0:
        # z_p == z_n == z ; softplus(-z) = softplus(z) - z  (single EUP pass)
        z = logits + bias
        sp_n = jax.nn.softplus(z)        # BCE-with-logits, target = 0
        sp_p = sp_n - z                  # BCE-with-logits, target = 1
    else:
        z_p = (logits - M_MARGIN + bias) / R
        z_n = (logits + M_MARGIN + bias) * R
        sp_p = jax.nn.softplus(-z_p)
        sp_n = jax.nn.softplus(z_n)

    # NOTE: y is a (TN,1) int32 column (lane-padded, but fetched once per N-tile);
    # y_bank tile is lane-dense (1,TM).
    eqf = (y_ref[...] == yb_ref[...]).astype(jnp.float32)               # (TN, TM)

    def fold(a):
        # (TN, TM) -> (8, TM) lane-dense partial sums; pure VPU vreg adds.
        # The expensive cross-lane/sublane collapse happens once, in the wrapper.
        return a.reshape(tn // 8, 8, tm).sum(axis=0)

    o_ref[0, 0, :, :] += fold(sp_p * eqf)
    o_ref[0, 1, :, :] += fold(eqf)
    o_ref[0, 2, :, :] += fold(sp_n * (1.0 - eqf))

    # ---- diagonal (self-pair) correction: only on the bank tile whose column
    #      range overlaps [pt + i*TN, pt + i*TN + TN).
    pt = pt_ref[0]
    row0 = pt + i * tn            # bank column of this N-tile's first self pair
    col0 = j * tm
    overlaps = jnp.logical_and(col0 < row0 + tn, row0 < col0 + tm)

    @pl.when(overlaps)
    def _diag_fix():
        r = lax.broadcasted_iota(jnp.int32, (tn, tm), 0)
        c = lax.broadcasted_iota(jnp.int32, (tn, tm), 1)
        diagf = jnp.where((c + col0) == (r + row0), eqf, 0.0)
        o_ref[0, 0, :, :] -= fold(sp_p * diagf)   # drop self pairs from positives
        o_ref[0, 1, :, :] -= fold(diagf)
        o_ref[0, 3, :, :] += fold(diagf)          # track removed count for count_neg


def simple_forward(x, y, x_bank, y_bank, bias, *, rank=0, bank_tile=128):
    """SimPLE forward.  x:(N,D), y:(N,), x_bank:(M,D), y_bank:(M,), bias:(1,)."""
    n, d = x.shape
    m = x_bank.shape[0]

    # N-tile: whole local batch if it fits a sublane-aligned block, else 128 rows.
    tn = n if n <= 128 else 128
    assert n % tn == 0 and tn % 8 == 0, "batch size must be a multiple of 8"
    # Bank tile: rows per streamed tile, multiple of 128.  Production sizing note:
    #   budget xn(TN*D bf16) + 2 double-buffered (TM*D f32) bank tiles + out planes
    #   against scoped VMEM (v5e 16 MiB, v6e 32 MiB, v7x 32 MiB of 64 MiB physical),
    #   e.g. D=512 f32 -> TM ~ 4096 (v6e) / ~2048 (v7x, v5e).
    tm = bank_tile
    assert tm % 128 == 0 and m % tm == 0, "bank size must divide into 128-row tiles"
    g_n, g_m = n // tn, m // tm

    y_col = y.reshape(n, 1).astype(jnp.int32)
    yb_row = y_bank.reshape(1, m).astype(jnp.int32)   # lane-dense bank labels
    pt = jnp.array([rank * n], dtype=jnp.int32)
    bias = bias.reshape(1).astype(jnp.float32)

    partial_sums = pl.pallas_call(
        _simple_kernel,
        out_shape=jax.ShapeDtypeStruct((g_n, 4, 8, tm), jnp.float32),
        grid=(g_n, g_m),
        in_specs=[
            pl.BlockSpec(memory_space=pltpu.MemorySpace.SMEM),     # bias (1,) f32
            pl.BlockSpec(memory_space=pltpu.MemorySpace.SMEM),     # pt   (1,) i32
            pl.BlockSpec((tn, d), lambda i, j: (i, 0)),            # x       (resident per i)
            pl.BlockSpec((tm, d), lambda i, j: (j, 0)),            # x_bank  (streamed)
            pl.BlockSpec((tn, 1), lambda i, j: (i, 0)),            # y column
            pl.BlockSpec((1, tm), lambda i, j: (0, j)),            # y_bank row (lane-dense)
        ],
        out_specs=pl.BlockSpec((1, 4, 8, tm), lambda i, j: (i, 0, 0, 0)),
        scratch_shapes=[pltpu.VMEM((tn, d), jnp.bfloat16)],        # cached normalized x
        compiler_params=pltpu.CompilerParams(
            dimension_semantics=("parallel", "arbitrary")),
    )(bias, pt, x, x_bank, y_col, yb_row)

    planes = jnp.sum(partial_sums, axis=(0, 2, 3))                 # (4,) final collapse
    sum_p, cnt_p, sum_n, cnt_diag = planes[0], planes[1], planes[2], planes[3]
    cnt_n = jnp.float32(n * m) - (cnt_p + cnt_diag)                # |{!eq}| analytically
    # NOTE: matches PyTorch — an empty positive/negative set yields NaN (0/0).
    loss_p = sum_p / cnt_p
    loss_n = sum_n / cnt_n
    loss = ALPHA * loss_p + (1.0 - ALPHA) * loss_n
    return LW * loss


# ----- pure-JAX reference (for a silent correctness check) -------------------
def _reference_forward(x, y, x_bank, y_bank, bias, rank=0):
    xn = x / jnp.maximum(jnp.linalg.norm(x, axis=-1, keepdims=True), 1e-12)
    xbn = x_bank / jnp.maximum(jnp.linalg.norm(x_bank, axis=-1, keepdims=True), 1e-12)
    logits = xn @ xbn.T - COS_B_THETA
    eq = y[:, None] == y_bank[None, :]
    mask_n = ~eq
    n = x.shape[0]
    idx = jnp.arange(n)
    mask_p = eq.at[idx, rank * n + idx].set(False)
    z_p = (logits - M_MARGIN + bias[0]) / R
    z_n = (logits + M_MARGIN + bias[0]) * R
    loss_p = jnp.sum(jnp.where(mask_p, jax.nn.softplus(-z_p), 0.0)) / jnp.sum(mask_p)
    loss_n = jnp.sum(jnp.where(mask_n, jax.nn.softplus(z_n), 0.0)) / jnp.sum(mask_n)
    return LW * (ALPHA * loss_p + (1.0 - ALPHA) * loss_n)


if __name__ == "__main__":
    key = jax.random.PRNGKey(0)
    N, D, M = 8, 128, 256          # two bank tiles (TM=128) -> exercises accumulation

    k_x, k_extra = jax.random.split(key)
    x = jax.random.normal(k_x, (N, D), dtype=jnp.float32)
    x_extra = jax.random.normal(k_extra, (M - N, D), dtype=jnp.float32)

    # labels with repeats guarantee a non-empty positive set after self-pair removal
    y = jnp.array([0, 0, 1, 1, 2, 2, 3, 3], dtype=jnp.int32)
    y_extra = jnp.arange(M - N, dtype=jnp.int32) % 16

    # the bank contains this device's batch at rows [pt : pt+N]  (pt = rank*N = 0)
    x_bank = jnp.concatenate([x, x_extra], axis=0)          # (256, 128)
    y_bank = jnp.concatenate([y, y_extra], axis=0)          # (256,)

    # deterministic parameter init, as in the module's __init__
    bias = jnp.full((1,), INIT_BIAS, dtype=jnp.float32)

    loss = simple_forward(x, y, x_bank, y_bank, bias, rank=0, bank_tile=128)
    loss = jax.block_until_ready(loss)

    ref = _reference_forward(x, y, x_bank, y_bank, bias, rank=0)
    assert jnp.isfinite(loss), "loss is not finite"
    # bf16 MXU operands (normalized in f32 first) -> loosened tolerance vs f32 reference
    assert jnp.allclose(loss, ref, rtol=2e-2, atol=2e-2), (loss, ref)

    print("KERNEL_OK")
</pallas_src>

<mosaic_0001>
module attributes {stable_mosaic.version = 11 : i64} {
  func.func @_simple_kernel(%arg0: i32, %arg1: i32, %arg2: memref<1xf32, #tpu.memory_space<smem>>, %arg3: memref<1xi32, #tpu.memory_space<smem>>, %arg4: memref<8x128xf32, #tpu.memory_space<vmem>>, %arg5: memref<128x128xf32, #tpu.memory_space<vmem>>, %arg6: memref<8x1xi32, #tpu.memory_space<vmem>>, %arg7: memref<1x128xi32, #tpu.memory_space<vmem>>, %arg8: memref<1x4x8x128xf32, #tpu.memory_space<vmem>>, %arg9: memref<8x128xbf16, #tpu.memory_space<vmem>>) attributes {dimension_semantics = [#tpu.dimension_semantics<parallel>, #tpu.dimension_semantics<arbitrary>], iteration_bounds = array<i64: 1, 2>, scalar_prefetch = 0 : i64, scratch_operands = 1 : i64, tpu.core_type = #tpu.core_type<tc>, window_params = [{transform_indices = @transform_0, window_bounds = array<i64: 1>}, {transform_indices = @transform_1, window_bounds = array<i64: 1>}, {transform_indices = @transform_2, window_bounds = array<i64: 8, 128>}, {transform_indices = @transform_3, window_bounds = array<i64: 128, 128>}, {transform_indices = @transform_4, window_bounds = array<i64: 8, 1>}, {transform_indices = @transform_5, window_bounds = array<i64: 1, 128>}, {transform_indices = @transform_6, window_bounds = array<i64: 1, 4, 8, 128>}]} {
    %c0_i32 = arith.constant 0 : i32
    %0 = arith.cmpi eq, %arg1, %c0_i32 : i32
    %1 = arith.extui %0 : i1 to i32
    %c0_i32_0 = arith.constant 0 : i32
    %2 = arith.cmpi ne, %1, %c0_i32_0 : i32
    scf.if %2 {
      %c0_44 = arith.constant 0 : index
      %c0_45 = arith.constant 0 : index
      %81 = vector.load %arg4[%c0_44, %c0_45] : memref<8x128xf32, #tpu.memory_space<vmem>>, vector<8x128xf32>
      %82 = arith.mulf %81, %81 : vector<8x128xf32>
      %cst_46 = arith.constant dense<0.000000e+00> : vector<8xf32>
      %83 = vector.multi_reduction <add>, %82, %cst_46 [1] : vector<8x128xf32> to vector<8xf32>
      %84 = vector.shape_cast %83 : vector<8xf32> to vector<8x1xf32>
      %cst_47 = arith.constant 1.000000e-24 : f32
      %85 = vector.broadcast %cst_47 : f32 to vector<8x1xf32>
      %86 = arith.maximumf %84, %85 : vector<8x1xf32>
      %87 = math.rsqrt %86 : vector<8x1xf32>
      %88 = vector.broadcast %87 : vector<8x1xf32> to vector<8x128xf32>
      %89 = arith.mulf %81, %88 : vector<8x128xf32>
      %90 = arith.truncf %89 : vector<8x128xf32> to vector<8x128xbf16>
      %c0_48 = arith.constant 0 : index
      %c0_49 = arith.constant 0 : index
      %91 = vector.load %arg9[%c0_48, %c0_49] : memref<8x128xbf16, #tpu.memory_space<vmem>>, vector<8x128xbf16>
      tpu.vector_store %arg9[%c0_48, %c0_49], %90 {strides = array<i32>} : memref<8x128xbf16, #tpu.memory_space<vmem>>, vector<8x128xbf16>,
      %cst_50 = arith.constant 0.000000e+00 : f32
      %92 = vector.broadcast %cst_50 : f32 to vector<1x4x8x128xf32>
      %c0_51 = arith.constant 0 : index
      %c0_52 = arith.constant 0 : index
      %c0_53 = arith.constant 0 : index
      %c0_54 = arith.constant 0 : index
      %93 = vector.load %arg8[%c0_51, %c0_52, %c0_53, %c0_54] : memref<1x4x8x128xf32, #tpu.memory_space<vmem>>, vector<1x4x8x128xf32>
      tpu.vector_store %arg8[%c0_51, %c0_52, %c0_53, %c0_54], %92 {strides = array<i32>} : memref<1x4x8x128xf32, #tpu.memory_space<vmem>>, vector<1x4x8x128xf32>,
    } else {
    }
    %c0 = arith.constant 0 : index
    %c0_1 = arith.constant 0 : index
    %3 = vector.load %arg5[%c0, %c0_1] : memref<128x128xf32, #tpu.memory_space<vmem>>, vector<128x128xf32>
    %4 = arith.mulf %3, %3 : vector<128x128xf32>
    %cst = arith.constant dense<0.000000e+00> : vector<128xf32>
    %5 = vector.multi_reduction <add>, %4, %cst [1] : vector<128x128xf32> to vector<128xf32>
    %6 = vector.shape_cast %5 : vector<128xf32> to vector<128x1xf32>
    %cst_2 = arith.constant 1.000000e-24 : f32
    %7 = vector.broadcast %cst_2 : f32 to vector<128x1xf32>
    %8 = arith.maximumf %6, %7 : vector<128x1xf32>
    %9 = math.rsqrt %8 : vector<128x1xf32>
    %10 = vector.broadcast %9 : vector<128x1xf32> to vector<128x128xf32>
    %11 = arith.mulf %3, %10 : vector<128x128xf32>
    %12 = arith.truncf %11 : vector<128x128xf32> to vector<128x128xbf16>
    %c0_3 = arith.constant 0 : index
    %c0_4 = arith.constant 0 : index
    %13 = vector.load %arg9[%c0_3, %c0_4] : memref<8x128xbf16, #tpu.memory_space<vmem>>, vector<8x128xbf16>
    %cst_5 = arith.constant dense<0.000000e+00> : vector<8x128xf32>
    %14 = tpu.matmul %13, %12, %cst_5 {dimension_numbers = #tpu.dot_dimension_numbers<[1], [1], [0], [0], [0, 0, 1, 0], [], []>} : vector<8x128xbf16>, vector<128x128xbf16>, vector<8x128xf32> -> vector<8x128xf32>
    %cst_6 = arith.constant 0.955336511 : f32
    %15 = vector.broadcast %cst_6 : f32 to vector<8x128xf32>
    %16 = arith.subf %14, %15 : vector<8x128xf32>
    %c0_7 = arith.constant 0 : index
    %17 = memref.load %arg2[%c0_7] : memref<1xf32, #tpu.memory_space<smem>>
    %18 = vector.broadcast %17 : f32 to vector<8x128xf32>
    %19 = arith.addf %16, %18 : vector<8x128xf32>
    %cst_8 = arith.constant 0.000000e+00 : f32
    %20 = vector.broadcast %cst_8 : f32 to vector<8x128xf32>
    %21 = arith.maximumf %19, %20 : vector<8x128xf32>
    %22 = vector.broadcast %cst_8 : f32 to vector<8x128xf32>
    %23 = arith.subf %19, %22 : vector<8x128xf32>
    %24 = arith.cmpf one, %23, %23 : vector<8x128xf32>
    %25 = vector.broadcast %cst_8 : f32 to vector<8x128xf32>
    %26 = arith.addf %19, %25 : vector<8x128xf32>
    %27 = math.absf %23 : vector<8x128xf32>
    %cst_9 = arith.constant 0.000000e+00 : f32
    %28 = vector.broadcast %cst_9 : f32 to vector<8x128xf32>
    %29 = arith.subf %28, %27 : vector<8x128xf32>
    %30 = math.exp %29 : vector<8x128xf32>
    %31 = math.log1p %30 : vector<8x128xf32>
    %32 = arith.addf %21, %31 : vector<8x128xf32>
    %33 = arith.select %24, %26, %32 : vector<8x128xi1>, vector<8x128xf32>
    %34 = arith.subf %33, %19 : vector<8x128xf32>
    %c0_10 = arith.constant 0 : index
    %c0_11 = arith.constant 0 : index
    %35 = vector.load %arg6[%c0_10, %c0_11] : memref<8x1xi32, #tpu.memory_space<vmem>>, vector<8x1xi32>
    %c0_12 = arith.constant 0 : index
    %c0_13 = arith.constant 0 : index
    %36 = vector.load %arg7[%c0_12, %c0_13] : memref<1x128xi32, #tpu.memory_space<vmem>>, vector<1x128xi32>
    %37 = vector.broadcast %35 : vector<8x1xi32> to vector<8x128xi32>
    %38 = vector.broadcast %36 : vector<1x128xi32> to vector<8x128xi32>
    %39 = arith.cmpi eq, %37, %38 : vector<8x128xi32>
    %40 = arith.extui %39 : vector<8x128xi1> to vector<8x128xi32>
    %41 = arith.sitofp %40 : vector<8x128xi32> to vector<8x128xf32>
    %c0_14 = arith.constant 0 : index
    %c0_15 = arith.constant 0 : index
    %c0_16 = arith.constant 0 : index
    %c0_17 = arith.constant 0 : index
    %42 = vector.load %arg8[%c0_14, %c0_15, %c0_16, %c0_17] : memref<1x4x8x128xf32, #tpu.memory_space<vmem>>, vector<1x1x8x128xf32>
    %43 = vector.shape_cast %42 : vector<1x1x8x128xf32> to vector<8x128xf32>
    %44 = arith.mulf %34, %41 : vector<8x128xf32>
    %45 = vector.shape_cast %44 : vector<8x128xf32> to vector<1x8x128xf32>
    %cst_18 = arith.constant dense<0.000000e+00> : vector<8x128xf32>
    %46 = vector.multi_reduction <add>, %45, %cst_18 [0] : vector<1x8x128xf32> to vector<8x128xf32>
    %47 = arith.addf %43, %46 : vector<8x128xf32>
    %c0_19 = arith.constant 0 : index
    %c0_20 = arith.constant 0 : index
    %c0_21 = arith.constant 0 : index
    %c0_22 = arith.constant 0 : index
    %48 = vector.load %arg8[%c0_19, %c0_20, %c0_21, %c0_22] : memref<1x4x8x128xf32, #tpu.memory_space<vmem>>, vector<1x1x8x128xf32>
    %49 = vector.shape_cast %48 : vector<1x1x8x128xf32> to vector<8x128xf32>
    %50 = vector.shape_cast %47 : vector<8x128xf32> to vector<1x1x8x128xf32>
    tpu.vector_store %arg8[%c0_19, %c0_20, %c0_21, %c0_22], %50 {strides = array<i32>} : memref<1x4x8x128xf32, #tpu.memory_space<vmem>>, vector<1x1x8x128xf32>,
    %c0_23 = arith.constant 0 : index
    %c1 = arith.constant 1 : index
    %c0_24 = arith.constant 0 : index
    %c0_25 = arith.constant 0 : index
    %51 = vector.load %arg8[%c0_23, %c1, %c0_24, %c0_25] : memref<1x4x8x128xf32, #tpu.memory_space<vmem>>, vector<1x1x8x128xf32>
    %52 = vector.shape_cast %51 : vector<1x1x8x128xf32> to vector<8x128xf32>
    %53 = vector.shape_cast %41 : vector<8x128xf32> to vector<1x8x128xf32>
    %cst_26 = arith.constant dense<0.000000e+00> : vector<8x128xf32>
    %54 = vector.multi_reduction <add>, %53, %cst_26 [0] : vector<1x8x128xf32> to vector<8x128xf32>
    %55 = arith.addf %52, %54 : vector<8x128xf32>
    %c0_27 = arith.constant 0 : index
    %c1_28 = arith.constant 1 : index
    %c0_29 = arith.constant 0 : index
    %c0_30 = arith.constant 0 : index
    %56 = vector.load %arg8[%c0_27, %c1_28, %c0_29, %c0_30] : memref<1x4x8x128xf32, #tpu.memory_space<vmem>>, vector<1x1x8x128xf32>
    %57 = vector.shape_cast %56 : vector<1x1x8x128xf32> to vector<8x128xf32>
    %58 = vector.shape_cast %55 : vector<8x128xf32> to vector<1x1x8x128xf32>
    tpu.vector_store %arg8[%c0_27, %c1_28, %c0_29, %c0_30], %58 {strides = array<i32>} : memref<1x4x8x128xf32, #tpu.memory_space<vmem>>, vector<1x1x8x128xf32>,
    %c0_31 = arith.constant 0 : index
    %c2 = arith.constant 2 : index
    %c0_32 = arith.constant 0 : index
    %c0_33 = arith.constant 0 : index
    %59 = vector.load %arg8[%c0_31, %c2, %c0_32, %c0_33] : memref<1x4x8x128xf32, #tpu.memory_space<vmem>>, vector<1x1x8x128xf32>
    %60 = vector.shape_cast %59 : vector<1x1x8x128xf32> to vector<8x128xf32>
    %cst_34 = arith.constant 1.000000e+00 : f32
    %61 = vector.broadcast %cst_34 : f32 to vector<8x128xf32>
    %62 = arith.subf %61, %41 : vector<8x128xf32>
    %63 = arith.mulf %33, %62 : vector<8x128xf32>
    %64 = vector.shape_cast %63 : vector<8x128xf32> to vector<1x8x128xf32>
    %cst_35 = arith.constant dense<0.000000e+00> : vector<8x128xf32>
    %65 = vector.multi_reduction <add>, %64, %cst_35 [0] : vector<1x8x128xf32> to vector<8x128xf32>
    %66 = arith.addf %60, %65 : vector<8x128xf32>
    %c0_36 = arith.constant 0 : index
    %c2_37 = arith.constant 2 : index
    %c0_38 = arith.constant 0 : index
    %c0_39 = arith.constant 0 : index
    %67 = vector.load %arg8[%c0_36, %c2_37, %c0_38, %c0_39] : memref<1x4x8x128xf32, #tpu.memory_space<vmem>>, vector<1x1x8x128xf32>
    %68 = vector.shape_cast %67 : vector<1x1x8x128xf32> to vector<8x128xf32>
    %69 = vector.shape_cast %66 : vector<8x128xf32> to vector<1x1x8x128xf32>
    tpu.vector_store %arg8[%c0_36, %c2_37, %c0_38, %c0_39], %69 {strides = array<i32>} : memref<1x4x8x128xf32, #tpu.memory_space<vmem>>, vector<1x1x8x128xf32>,
    %c0_40 = arith.constant 0 : index
    %70 = memref.load %arg3[%c0_40] : memref<1xi32, #tpu.memory_space<smem>>
    %c8_i32 = arith.constant 8 : i32
    %71 = arith.muli %arg0, %c8_i32 : i32
    %72 = arith.addi %70, %71 : i32
    %c128_i32 = arith.constant 128 : i32
    %73 = arith.muli %arg1, %c128_i32 : i32
    %c8_i32_41 = arith.constant 8 : i32
    %74 = arith.addi %72, %c8_i32_41 : i32
    %75 = arith.cmpi slt, %73, %74 : i32
    %c128_i32_42 = arith.constant 128 : i32
    %76 = arith.addi %73, %c128_i32_42 : i32
    %77 = arith.cmpi slt, %72, %76 : i32
    %78 = arith.andi %75, %77 : i1
    %79 = arith.extui %78 : i1 to i32
    %c0_i32_43 = arith.constant 0 : i32
    %80 = arith.cmpi ne, %79, %c0_i32_43 : i32
    scf.if %80 {
      %81 = tpu.iota {dimensions = array<i32: 0>} : vector<8x128xi32>
      %82 = tpu.iota {dimensions = array<i32: 1>} : vector<8x128xi32>
      %83 = vector.broadcast %73 : i32 to vector<8x128xi32>
      %84 = arith.addi %82, %83 : vector<8x128xi32>
      %85 = vector.broadcast %72 : i32 to vector<8x128xi32>
      %86 = arith.addi %81, %85 : vector<8x128xi32>
      %87 = arith.cmpi eq, %84, %86 : vector<8x128xi32>
      %cst_44 = arith.constant 0.000000e+00 : f32
      %88 = vector.broadcast %cst_44 : f32 to vector<8x128xf32>
      %89 = arith.select %87, %41, %88 : vector<8x128xi1>, vector<8x128xf32>
      %c0_45 = arith.constant 0 : index
      %c0_46 = arith.constant 0 : index
      %c0_47 = arith.constant 0 : index
      %c0_48 = arith.constant 0 : index
      %90 = vector.load %arg8[%c0_45, %c0_46, %c0_47, %c0_48] : memref<1x4x8x128xf32, #tpu.memory_space<vmem>>, vector<1x1x8x128xf32>
      %91 = vector.shape_cast %90 : vector<1x1x8x128xf32> to vector<8x128xf32>
      %92 = arith.mulf %34, %89 : vector<8x128xf32>
      %93 = vector.shape_cast %92 : vector<8x128xf32> to vector<1x8x128xf32>
      %cst_49 = arith.constant dense<0.000000e+00> : vector<8x128xf32>
      %94 = vector.multi_reduction <add>, %93, %cst_49 [0] : vector<1x8x128xf32> to vector<8x128xf32>
      %95 = arith.subf %91, %94 : vector<8x128xf32>
      %c0_50 = arith.constant 0 : index
      %c0_51 = arith.constant 0 : index
      %c0_52 = arith.constant 0 : index
      %c0_53 = arith.constant 0 : index
      %96 = vector.load %arg8[%c0_50, %c0_51, %c0_52, %c0_53] : memref<1x4x8x128xf32, #tpu.memory_space<vmem>>, vector<1x1x8x128xf32>
      %97 = vector.shape_cast %96 : vector<1x1x8x128xf32> to vector<8x128xf32>
      %98 = vector.shape_cast %95 : vector<8x128xf32> to vector<1x1x8x128xf32>
      tpu.vector_store %arg8[%c0_50, %c0_51, %c0_52, %c0_53], %98 {strides = array<i32>} : memref<1x4x8x128xf32, #tpu.memory_space<vmem>>, vector<1x1x8x128xf32>,
      %c0_54 = arith.constant 0 : index
      %c1_55 = arith.constant 1 : index
      %c0_56 = arith.constant 0 : index
      %c0_57 = arith.constant 0 : index
      %99 = vector.load %arg8[%c0_54, %c1_55, %c0_56, %c0_57] : memref<1x4x8x128xf32, #tpu.memory_space<vmem>>, vector<1x1x8x128xf32>
      %100 = vector.shape_cast %99 : vector<1x1x8x128xf32> to vector<8x128xf32>
      %101 = vector.shape_cast %89 : vector<8x128xf32> to vector<1x8x128xf32>
      %cst_58 = arith.constant dense<0.000000e+00> : vector<8x128xf32>
      %102 = vector.multi_reduction <add>, %101, %cst_58 [0] : vector<1x8x128xf32> to vector<8x128xf32>
      %103 = arith.subf %100, %102 : vector<8x128xf32>
      %c0_59 = arith.constant 0 : index
      %c1_60 = arith.constant 1 : index
      %c0_61 = arith.constant 0 : index
      %c0_62 = arith.constant 0 : index
      %104 = vector.load %arg8[%c0_59, %c1_60, %c0_61, %c0_62] : memref<1x4x8x128xf32, #tpu.memory_space<vmem>>, vector<1x1x8x128xf32>
      %105 = vector.shape_cast %104 : vector<1x1x8x128xf32> to vector<8x128xf32>
      %106 = vector.shape_cast %103 : vector<8x128xf32> to vector<1x1x8x128xf32>
      tpu.vector_store %arg8[%c0_59, %c1_60, %c0_61, %c0_62], %106 {strides = array<i32>} : memref<1x4x8x128xf32, #tpu.memory_space<vmem>>, vector<1x1x8x128xf32>,
      %c0_63 = arith.constant 0 : index
      %c3 = arith.constant 3 : index
      %c0_64 = arith.constant 0 : index
      %c0_65 = arith.constant 0 : index
      %107 = vector.load %arg8[%c0_63, %c3, %c0_64, %c0_65] : memref<1x4x8x128xf32, #tpu.memory_space<vmem>>, vector<1x1x8x128xf32>
      %108 = vector.shape_cast %107 : vector<1x1x8x128xf32> to vector<8x128xf32>
      %109 = vector.shape_cast %89 : vector<8x128xf32> to vector<1x8x128xf32>
      %cst_66 = arith.constant dense<0.000000e+00> : vector<8x128xf32>
      %110 = vector.multi_reduction <add>, %109, %cst_66 [0] : vector<1x8x128xf32> to vector<8x128xf32>
      %111 = arith.addf %108, %110 : vector<8x128xf32>
      %c0_67 = arith.constant 0 : index
      %c3_68 = arith.constant 3 : index
      %c0_69 = arith.constant 0 : index
      %c0_70 = arith.constant 0 : index
      %112 = vector.load %arg8[%c0_67, %c3_68, %c0_69, %c0_70] : memref<1x4x8x128xf32, #tpu.memory_space<vmem>>, vector<1x1x8x128xf32>
      %113 = vector.shape_cast %112 : vector<1x1x8x128xf32> to vector<8x128xf32>
      %114 = vector.shape_cast %111 : vector<8x128xf32> to vector<1x1x8x128xf32>
      tpu.vector_store %arg8[%c0_67, %c3_68, %c0_69, %c0_70], %114 {strides = array<i32>} : memref<1x4x8x128xf32, #tpu.memory_space<vmem>>, vector<1x1x8x128xf32>,
    } else {
    }
    return
  }
  func.func @transform_0(%arg0: i32, %arg1: i32) -> i32 {
    %c0_i32 = arith.constant 0 : i32
    %c0_i32_0 = arith.constant 0 : i32
    return %c0_i32 : i32
  }
  func.func @transform_1(%arg0: i32, %arg1: i32) -> i32 {
    %c0_i32 = arith.constant 0 : i32
    %c0_i32_0 = arith.constant 0 : i32
    return %c0_i32 : i32
  }
  func.func @transform_2(%arg0: i32, %arg1: i32) -> (i32, i32) {
    %c0_i32 = arith.constant 0 : i32
    %c0_i32_0 = arith.constant 0 : i32
    return %arg0, %c0_i32 : i32, i32
  }
  func.func @transform_3(%arg0: i32, %arg1: i32) -> (i32, i32) {
    %c0_i32 = arith.constant 0 : i32
    %c0_i32_0 = arith.constant 0 : i32
    return %arg1, %c0_i32 : i32, i32
  }
  func.func @transform_4(%arg0: i32, %arg1: i32) -> (i32, i32) {
    %c0_i32 = arith.constant 0 : i32
    %c0_i32_0 = arith.constant 0 : i32
    return %arg0, %c0_i32 : i32, i32
  }
  func.func @transform_5(%arg0: i32, %arg1: i32) -> (i32, i32) {
    %c0_i32 = arith.constant 0 : i32
    %c0_i32_0 = arith.constant 0 : i32
    return %c0_i32, %arg1 : i32, i32
  }
  func.func @transform_6(%arg0: i32, %arg1: i32) -> (i32, i32, i32, i32) {
    %c0_i32 = arith.constant 0 : i32
    %c0_i32_0 = arith.constant 0 : i32
    %c0_i32_1 = arith.constant 0 : i32
    %c0_i32_2 = arith.constant 0 : i32
    return %arg0, %c0_i32, %c0_i32_0, %c0_i32_1 : i32, i32, i32, i32
  }
}

</mosaic_0001>

<llo_original>
// kernel: tpu_custom_call.1
$region0: #{tpu_custom_call.1}
  #allocation0 [shape = 'u32[]', space=smem, size = 0x4, offset = 0x4, fixed_abs, tag = 'smem constant byte address 0x4 - core index']
  #allocation1 [shape = 'u32[144,128]{1,0:T(1,128)}', space=vmem, size = 0x12000, scoped, tag = 'internal scratch']
  #allocation2 [shape = 'bf16[8,128]{1,0:T(8,128)(2,1)}', space=vmem, size = 0x800, scoped, tag = 'scratch operand']
  #allocation3 [shape = 'f32[1]{0:T(128)S(6)}', space=smem, size = 0x200, scoped, tag = 'scoped memory for tpu_custom_call.1']
  #allocation4 [shape = 's32[1]{0:T(128)S(6)}', space=smem, size = 0x200, scoped, tag = 'scoped memory for tpu_custom_call.1']
  %s0 = inlined_call_operand.<no memory space> [shape: f32[1], index: 0, kind: input, shape index: {}]
  %s1 = inlined_call_operand.<no memory space> [shape: s32[1], index: 1, kind: input, shape index: {}]
  %s2 = inlined_call_operand.vmem [shape: f32[8,128], index: 2, kind: input, shape index: {}]
  %s3 = inlined_call_operand.hbm [shape: f32[256,128], index: 3, kind: input, shape index: {}]
  %s4 = inlined_call_operand.vmem [shape: s32[8,1], index: 4, kind: input, shape index: {}]
  %s5 = inlined_call_operand.vmem [shape: s32[1,256], index: 5, kind: input, shape index: {}]
  %s6 = inlined_call_operand.hbm [shape: f32[1,4,8,128], index: 6, kind: output, shape index: {}]
  %s7 = sld [smem:[#allocation0]]
  $region69: #{tpu_custom_call.1} parent=0
    _
  %s9 = ssub.s32 1, %s7
  %s10 = scalar_select 0, %s9, %s7
  %11 = sst [smem:[#allocation3]] %s0
  %12 = sst [smem:[#allocation4]] %s1
  $region1: #{tpu_custom_call.1} parent=0
    #allocation5 [shape = 'u8[131072]{0}', space=vmem, size = 0x20000, scoped, tag = 'input window, operand 3']
    #allocation6 [shape = 's32[2]{0}', space=sflag, size = 0x8, scoped, tag = 'scoped memory for tpu_custom_call.1']
    #allocation7 [shape = 's32[2]{0}', space=sflag, size = 0x8, scoped, tag = 'scoped memory for tpu_custom_call.1']
    #allocation8 [shape = 'u8[16384]{0}', space=vmem, size = 0x4000, scoped, tag = 'output window, operand 0, single buffered']
    %13 = vsyncpa [#allocation6], 0
    %s14 = scalar_lea.sflag [#allocation6], 1
    %15 = vsyncpa %s14, 0
    %16 = vsyncpa [#allocation7], 0
    loop: start=0, step=1, limit=4
    $region2: #{tpu_custom_call.1} parent=1 // loop_pre_header
      _
    $region3: #{tpu_custom_call.1} parent=1 // loop_header
      %s18 = sphi 0, %s22
      %p19 = scmp.ge.s32.totalorder %s18, 4
      %s25 = sphi 0, %s37
      %s26 = sphi 0, %s33
      %s27 = sphi 0, %s25
      %s28 = sphi 0, %s26
      %s29 = sphi 0, %s27
      %s30 = sphi 0, %s28
      %s38 = sphi 0, %s38
      %s40 = sphi 0, %s38
      %s41 = sphi 0, %s40
      %s55 = sphi 0, %s41
      %s59 = sphi 0, %s59
      %s61 = sphi 0, %s59
      %s62 = sphi 0, %s61
      %s76 = sphi 0, %s62
      %s82 = sphi 0, %s84
      %s85 = sphi 0, %s82
      %s86 = sphi 0, %s85
      %s102 = sphi 0, %s86
      %s108 = sphi 0, %s110
      %s111 = sphi 0, %s108
      %s112 = sphi 0, %s111
      %s128 = sphi 0, %s112
      %s134 = sphi 0, %s136
      %s137 = sphi 0, %s134
      %s138 = sphi 0, %s137
      %s154 = sphi 0, %s138
      %s160 = sphi 0, %s162
      %s163 = sphi 0, %s160
      %s164 = sphi 0, %s163
      %s180 = sphi 0, %s164
      %s186 = sphi 0, %s188
      %s189 = sphi 0, %s186
      %s190 = sphi 0, %s189
      %s206 = sphi 0, %s190
    $region4: #{tpu_custom_call.1} parent=1 // loop_header_branch
      %21 = sbr.rel (%p19) target = $region8
    $region5: #{tpu_custom_call.1} parent=1 // loop_body
      %s23 = ssub.s32 %s18, 1
      %s24 = ssub.s32 %s18, 2
      %s31 = sadd.s32 1, %s26
      %p32 = scmp.ge.s32.totalorder %s31, 2
      %s33 = scalar_select %p32, 0, %s31
      %s34 = sadd.s32 1, %s25
      %s35 = scalar_select %p32, %s34, %s25
      %p36 = scmp.ge.s32.totalorder %s35, 1
      %s37 = scalar_select %p36, 0, %s35
      %s39 = sadd.s32 %s38, 1
      %p42 = scmp.eq.s32.totalorder %s18, 1
      %p43 = scmp.ne.s32.totalorder %s38, %s40
      %p44 = scmp.eq.s32.totalorder %s18, 0
      %p45 = por %p43, %p44
      %p46 = scmp.ne.s32.totalorder %s38, %s40
      %p47 = scmp.eq.s32.totalorder %s23, 1
      %p48 = por %p46, %p47
      %p49 = scmp.ne.s32.totalorder %s40, %s41
      %p50 = scmp.eq.s32.totalorder %s23, 0
      %p51 = por %p49, %p50
      %p52 = scmp.ne.s32.totalorder %s40, %s41
      %p53 = scmp.eq.s32.totalorder %s24, 1
      %p54 = por %p52, %p53
      %p56 = scmp.ne.s32.totalorder %s41, %s55
      %p57 = scmp.eq.s32.totalorder %s24, 0
      %p58 = por %p56, %p57
      %s60 = sadd.s32 %s59, 1
      %p63 = scmp.eq.s32.totalorder %s18, 1
      %p64 = scmp.ne.s32.totalorder %s59, %s61
      %p65 = scmp.eq.s32.totalorder %s18, 0
      %p66 = por %p64, %p65
      %p67 = scmp.ne.s32.totalorder %s59, %s61
      %p68 = scmp.eq.s32.totalorder %s23, 1
      %p69 = por %p67, %p68
      %p70 = scmp.ne.s32.totalorder %s61, %s62
      %p71 = scmp.eq.s32.totalorder %s23, 0
      %p72 = por %p70, %p71
      %p73 = scmp.ne.s32.totalorder %s61, %s62
      %p74 = scmp.eq.s32.totalorder %s24, 1
      %p75 = por %p73, %p74
      %p77 = scmp.ne.s32.totalorder %s62, %s76
      %p78 = scmp.eq.s32.totalorder %s24, 0
      %p79 = por %p77, %p78
      %s80 = ssub.s32 %s25, %s37
      %p81 = scmp.eq.s32.totalorder %s80, 0
      %s83 = sadd.s32 %s82, 1
      %s84 = scalar_select %p81, %s82, %s83
      %p87 = pneg %p81
      %p88 = scmp.eq.s32.totalorder %s18, 1
      %p89 = por %p87, %p88
      %p90 = scmp.ne.s32.totalorder %s82, %s85
      %p91 = scmp.eq.s32.totalorder %s18, 0
      %p92 = por %p90, %p91
      %p93 = scmp.ne.s32.totalorder %s82, %s85
      %p94 = scmp.eq.s32.totalorder %s23, 1
      %p95 = por %p93, %p94
      %p96 = scmp.ne.s32.totalorder %s85, %s86
      %p97 = scmp.eq.s32.totalorder %s23, 0
      %p98 = por %p96, %p97
      %p99 = scmp.ne.s32.totalorder %s85, %s86
      %p100 = scmp.eq.s32.totalorder %s24, 1
      %p101 = por %p99, %p100
      %p103 = scmp.ne.s32.totalorder %s86, %s102
      %p104 = scmp.eq.s32.totalorder %s24, 0
      %p105 = por %p103, %p104
      %s106 = ssub.s32 %s26, %s33
      %p107 = scmp.eq.s32.totalorder %s106, 0
      %s109 = sadd.s32 %s108, 1
      %s110 = scalar_select %p107, %s108, %s109
      %p113 = pneg %p107
      %p114 = scmp.eq.s32.totalorder %s18, 1
      %p115 = por %p113, %p114
      %p116 = scmp.ne.s32.totalorder %s108, %s111
      %p117 = scmp.eq.s32.totalorder %s18, 0
      %p118 = por %p116, %p117
      %p119 = scmp.ne.s32.totalorder %s108, %s111
      %p120 = scmp.eq.s32.totalorder %s23, 1
      %p121 = por %p119, %p120
      %p122 = scmp.ne.s32.totalorder %s111, %s112
      %p123 = scmp.eq.s32.totalorder %s23, 0
      %p124 = por %p122, %p123
      %p125 = scmp.ne.s32.totalorder %s111, %s112
      %p126 = scmp.eq.s32.totalorder %s24, 1
      %p127 = por %p125, %p126
      %p129 = scmp.ne.s32.totalorder %s112, %s128
      %p130 = scmp.eq.s32.totalorder %s24, 0
      %p131 = por %p129, %p130
      %s132 = ssub.s32 %s25, %s37
      %p133 = scmp.eq.s32.totalorder %s132, 0
      %s135 = sadd.s32 %s134, 1
      %s136 = scalar_select %p133, %s134, %s135
      %p139 = pneg %p133
      %p140 = scmp.eq.s32.totalorder %s18, 1
      %p141 = por %p139, %p140
      %p142 = scmp.ne.s32.totalorder %s134, %s137
      %p143 = scmp.eq.s32.totalorder %s18, 0
      %p144 = por %p142, %p143
      %p145 = scmp.ne.s32.totalorder %s134, %s137
      %p146 = scmp.eq.s32.totalorder %s23, 1
      %p147 = por %p145, %p146
      %p148 = scmp.ne.s32.totalorder %s137, %s138
      %p149 = scmp.eq.s32.totalorder %s23, 0
      %p150 = por %p148, %p149
      %p151 = scmp.ne.s32.totalorder %s137, %s138
      %p152 = scmp.eq.s32.totalorder %s24, 1
      %p153 = por %p151, %p152
      %p155 = scmp.ne.s32.totalorder %s138, %s154
      %p156 = scmp.eq.s32.totalorder %s24, 0
      %p157 = por %p155, %p156
      %s158 = ssub.s32 %s26, %s33
      %p159 = scmp.eq.s32.totalorder %s158, 0
      %s161 = sadd.s32 %s160, 1
      %s162 = scalar_select %p159, %s160, %s161
      %p165 = pneg %p159
      %p166 = scmp.eq.s32.totalorder %s18, 1
      %p167 = por %p165, %p166
      %p168 = scmp.ne.s32.totalorder %s160, %s163
      %p169 = scmp.eq.s32.totalorder %s18, 0
      %p170 = por %p168, %p169
      %p171 = scmp.ne.s32.totalorder %s160, %s163
      %p172 = scmp.eq.s32.totalorder %s23, 1
      %p173 = por %p171, %p172
      %p174 = scmp.ne.s32.totalorder %s163, %s164
      %p175 = scmp.eq.s32.totalorder %s23, 0
      %p176 = por %p174, %p175
      %p177 = scmp.ne.s32.totalorder %s163, %s164
      %p178 = scmp.eq.s32.totalorder %s24, 1
      %p179 = por %p177, %p178
      %p181 = scmp.ne.s32.totalorder %s164, %s180
      %p182 = scmp.eq.s32.totalorder %s24, 0
      %p183 = por %p181, %p182
      %s184 = ssub.s32 %s25, %s37
      %p185 = scmp.eq.s32.totalorder %s184, 0
      %s187 = sadd.s32 %s186, 1
      %s188 = scalar_select %p185, %s186, %s187
      %p191 = pneg %p185
      %p192 = scmp.eq.s32.totalorder %s18, 1
      %p193 = por %p191, %p192
      %p194 = scmp.ne.s32.totalorder %s186, %s189
      %p195 = scmp.eq.s32.totalorder %s18, 0
      %p196 = por %p194, %p195
      %p197 = scmp.ne.s32.totalorder %s186, %s189
      %p198 = scmp.eq.s32.totalorder %s23, 1
      %p199 = por %p197, %p198
      %p200 = scmp.ne.s32.totalorder %s189, %s190
      %p201 = scmp.eq.s32.totalorder %s23, 0
      %p202 = por %p200, %p201
      %p203 = scmp.ne.s32.totalorder %s189, %s190
      %p204 = scmp.eq.s32.totalorder %s24, 1
      %p205 = por %p203, %p204
      %p207 = scmp.ne.s32.totalorder %s190, %s206
      %p208 = scmp.eq.s32.totalorder %s24, 0
      %p209 = por %p207, %p208
      %p210 = scmp.le.s32.totalorder 1, %s18
      %p211 = scmp.lt.s32.totalorder %s18, 3
      %p212 = pnand %p210, %p211
      %p213 = pneg %p212
      // Predicated region
      $region9: #{tpu_custom_call.1} parent=5 // pred_check
        _
      $region10: #{tpu_custom_call.1} parent=5 // pred_check_branch
        %215 = sbr.rel (%p212) target = $region12
      $region11: #{tpu_custom_call.1} parent=5 // pred_region
        %s216 = ssub.s32 %s18, 1
        // Predicated region
        $region13: #{tpu_custom_call.1} parent=11 // pred_check
          %p217 = pneg %p51
        $region14: #{tpu_custom_call.1} parent=11 // pred_check_branch
          %219 = sbr.rel (%p217) target = $region16
        $region15: #{tpu_custom_call.1} parent=11 // pred_region
          _
        $region16: #{tpu_custom_call.1} parent=11 // pred_fallthru
          _
        // Predicated region
        $region17: #{tpu_custom_call.1} parent=11 // pred_check
          %p220 = pneg %p72
        $region18: #{tpu_custom_call.1} parent=11 // pred_check_branch
          %222 = sbr.rel (%p220) target = $region20
        $region19: #{tpu_custom_call.1} parent=11 // pred_region
          _
        $region20: #{tpu_custom_call.1} parent=11 // pred_fallthru
          _
        // Predicated region
        $region21: #{tpu_custom_call.1} parent=11 // pred_check
          %p223 = pneg %p98
        $region22: #{tpu_custom_call.1} parent=11 // pred_check_branch
          %225 = sbr.rel (%p223) target = $region24
        $region23: #{tpu_custom_call.1} parent=11 // pred_region
          %p226 = scmp.lt.s32.totalorder %s27, 0
          %s227 = scalar_select %p226, %s27, 0
          %s228 = smul.addr %s227, 8
          %s229 = scalar_lea.vmem %s2, %s228
        $region24: #{tpu_custom_call.1} parent=11 // pred_fallthru
          _
        // Predicated region
        $region25: #{tpu_custom_call.1} parent=11 // pred_check
          %p230 = pneg %p150
        $region26: #{tpu_custom_call.1} parent=11 // pred_check_branch
          %232 = sbr.rel (%p230) target = $region28
        $region27: #{tpu_custom_call.1} parent=11 // pred_region
          %p233 = scmp.lt.s32.totalorder %s27, 0
          %s234 = scalar_select %p233, %s27, 0
          %s235 = smul.addr %s234, 8
          %s236 = scalar_lea.vmem %s4, %s235
        $region28: #{tpu_custom_call.1} parent=11 // pred_fallthru
          _
      $region12: #{tpu_custom_call.1} parent=5 // pred_fallthru
        _
      %p237 = scmp.lt.s32.totalorder %s18, 2
      // Predicated region
      $region29: #{tpu_custom_call.1} parent=5 // pred_check
        %p238 = pneg %p237
      $region30: #{tpu_custom_call.1} parent=5 // pred_check_branch
        %240 = sbr.rel (%p238) target = $region32
      $region31: #{tpu_custom_call.1} parent=5 // pred_region
        // Predicated region
        $region33: #{tpu_custom_call.1} parent=31 // pred_check
          %p241 = pneg %p118
        $region34: #{tpu_custom_call.1} parent=31 // pred_check_branch
          %243 = sbr.rel (%p241) target = $region36
        $region35: #{tpu_custom_call.1} parent=31 // pred_region
          %s244 = sand.u32 %s108, 1
          %s245 = scalar_lea.sflag [#allocation6], %s244
          %s246 = sand.u32 %s108, 1
          %s247 = smul.addr %s246, 128
          %s248 = scalar_lea.vmem [#allocation5], %s247
          %s249 = smul.u32 16, %s26
          %s251 = ssub.s32 2048, 2048
          %252 = vsyncadd %s245, %s251
          %s253 = smul.addr %s249, 128
          %s254 = scalar_lea.hbm %s3, %s253
          %s255 = sshll.u32 %s248, 4
          %s256 = int_to_ptr.vmem [resolvable:$true] %s255
          %261 = dma.hbm_to_vmem [thread:$0]  %s254, 2048, %s256, %s245, 128, 128, 8
        $region36: #{tpu_custom_call.1} parent=31 // pred_fallthru
          _
        // Predicated region
        $region37: #{tpu_custom_call.1} parent=31 // pred_check
          %p262 = pneg %p170
        $region38: #{tpu_custom_call.1} parent=31 // pred_check_branch
          %264 = sbr.rel (%p262) target = $region40
        $region39: #{tpu_custom_call.1} parent=31 // pred_region
          %p265 = scmp.lt.s32.totalorder %s26, 1
          %s266 = scalar_select %p265, %s26, 1
          %s267 = scalar_lea.vmem %s5, %s266
        $region40: #{tpu_custom_call.1} parent=31 // pred_fallthru
          _
      $region32: #{tpu_custom_call.1} parent=5 // pred_fallthru
        _
      %p268 = scmp.le.s32.totalorder 1, %s18
      %p269 = scmp.lt.s32.totalorder %s18, 3
      %p270 = pnand %p268, %p269
      %p271 = pneg %p270
      // Predicated region
      $region41: #{tpu_custom_call.1} parent=5 // pred_check
        _
      $region42: #{tpu_custom_call.1} parent=5 // pred_check_branch
        %273 = sbr.rel (%p270) target = $region44
      $region43: #{tpu_custom_call.1} parent=5 // pred_region
        %s274 = ssub.s32 %s18, 1
        %s275 = sand.u32 %s111, 1
        %s276 = scalar_lea.sflag [#allocation6], %s275
        %s277 = sand.u32 %s111, 1
        %s278 = smul.addr %s277, 128
        %s279 = scalar_lea.vmem [#allocation5], %s278
        // Predicated region
        $region45: #{tpu_custom_call.1} parent=43 // pred_check
          %p280 = pneg %p124
        $region46: #{tpu_custom_call.1} parent=43 // pred_check_branch
          %282 = sbr.rel (%p280) target = $region48
        $region47: #{tpu_custom_call.1} parent=43 // pred_region
          %283 = dma.done %s276, 2048
        $region48: #{tpu_custom_call.1} parent=43 // pred_fallthru
          _
        %p284 = pneg %p51
        %p285 = pneg %p48
        %p286 = pneg %p72
        %p287 = pneg %p69
        %p288 = scmp.lt.s32.totalorder %s27, 0
        %s289 = scalar_select %p288, %s27, 0
        %s290 = smul.addr %s289, 8
        %s291 = scalar_lea.vmem %s2, %s290
        %p292 = pneg %p98
        %p293 = pneg %p95
        %s294 = sand.u32 %s111, 1
        %s295 = scalar_lea.sflag [#allocation6], %s294
        %s296 = sand.u32 %s111, 1
        %s297 = smul.addr %s296, 128
        %s298 = scalar_lea.vmem [#allocation5], %s297
        %p299 = pneg %p124
        %p300 = pneg %p121
        %p301 = scmp.lt.s32.totalorder %s27, 0
        %s302 = scalar_select %p301, %s27, 0
        %s303 = smul.addr %s302, 8
        %s304 = scalar_lea.vmem %s4, %s303
        %p305 = pneg %p150
        %p306 = pneg %p147
        %p307 = scmp.lt.s32.totalorder %s28, 1
        %s308 = scalar_select %p307, %s28, 1
        %s309 = scalar_lea.vmem %s5, %s308
        %p310 = pneg %p176
        %p311 = pneg %p173
        %p312 = pneg %p202
        %p313 = pneg %p199
        %p314 = scmp.lt.s32.totalorder %s27, 0
        %s315 = scalar_select %p314, %s27, 0
        %s316 = smul.addr %s315, 8
        %s317 = scalar_lea.vmem %s2, %s316
        %s318 = smul.u32 16, %s28
        %p319 = scmp.lt.s32.totalorder %s27, 0
        %s320 = scalar_select %p319, %s27, 0
        %s321 = smul.addr %s320, 8
        %s322 = scalar_lea.vmem %s4, %s321
        %p323 = scmp.lt.s32.totalorder %s28, 1
        %s324 = scalar_select %p323, %s28, 1
        %s325 = scalar_lea.vmem %s5, %s324
        %p327 = scmp.eq.s32.totalorder %s28, 0
        // Predicated region
        $region49: #{tpu_custom_call.1} parent=43 // pred_check
          %p328 = pneg %p327
        $region50: #{tpu_custom_call.1} parent=43 // pred_check_branch
          %330 = sbr.rel (%p328) target = $region52
        $region51: #{tpu_custom_call.1} parent=43 // pred_region
          %v331 = vld [vmem:[%s317] sm:$0xff]
          %v332 = vmul.f32 %v331, %v331
          %333 = vadd.xlane.f32.xlu0 %v332
          %v334 = vpop.xlane.xlu0 %333
          %v335 = vmax.f32 %v334, 1e-24
          %v336 = vrsqrt.pop %v335
          %v337 = vmul.f32 %v331, %v336
          %v338 = vpack.c.bf16 %v337, %v337
          %339 = vst [vmem:[#allocation2] sm:$0xf] %v338
          %340 = vst [vmem:[#allocation8] sm:$0xff] 0.0
          %341 = vst [vmem:[#allocation8 + $0x8] sm:$0xff] 0.0
          %342 = vst [vmem:[#allocation8 + $0x10] sm:$0xff] 0.0
          %343 = vst [vmem:[#allocation8 + $0x18] sm:$0xff] 0.0
        $region52: #{tpu_custom_call.1} parent=43 // pred_fallthru
          _
        %v344 = vld [vmem:[%s279] sm:$0xff]
        %v345 = vld [vmem:[%s279 + $0x8] sm:$0xff]
        %v346 = vld [vmem:[%s279 + $0x10] sm:$0xff]
        %v347 = vld [vmem:[%s279 + $0x18] sm:$0xff]
        %v348 = vld [vmem:[%s279 + $0x20] sm:$0xff]
        %v349 = vld [vmem:[%s279 + $0x28] sm:$0xff]
        %v350 = vld [vmem:[%s279 + $0x30] sm:$0xff]
        %v351 = vld [vmem:[%s279 + $0x38] sm:$0xff]
        %v352 = vld [vmem:[%s279 + $0x40] sm:$0xff]
        %v353 = vld [vmem:[%s279 + $0x48] sm:$0xff]
        %v354 = vld [vmem:[%s279 + $0x50] sm:$0xff]
        %v355 = vld [vmem:[%s279 + $0x58] sm:$0xff]
        %v356 = vld [vmem:[%s279 + $0x60] sm:$0xff]
        %v357 = vld [vmem:[%s279 + $0x68] sm:$0xff]
        %v358 = vld [vmem:[%s279 + $0x70] sm:$0xff]
        %v359 = vld [vmem:[%s279 + $0x78] sm:$0xff]
        %v360 = vmul.f32 %v344, %v344
        %v361 = vmul.f32 %v345, %v345
        %v362 = vmul.f32 %v346, %v346
        %v363 = vmul.f32 %v347, %v347
        %v364 = vmul.f32 %v348, %v348
        %v365 = vmul.f32 %v349, %v349
        %v366 = vmul.f32 %v350, %v350
        %v367 = vmul.f32 %v351, %v351
        %v368 = vmul.f32 %v352, %v352
        %v369 = vmul.f32 %v353, %v353
        %v370 = vmul.f32 %v354, %v354
        %v371 = vmul.f32 %v355, %v355
        %v372 = vmul.f32 %v356, %v356
        %v373 = vmul.f32 %v357, %v357
        %v374 = vmul.f32 %v358, %v358
        %v375 = vmul.f32 %v359, %v359
        %376 = vadd.xlane.f32.xlu0 %v360
        %v377 = vpop.xlane.xlu0 %376
        %378 = vadd.xlane.f32.xlu0 %v361
        %v379 = vpop.xlane.xlu0 %378
        %380 = vadd.xlane.f32.xlu0 %v362
        %v381 = vpop.xlane.xlu0 %380
        %382 = vadd.xlane.f32.xlu0 %v363
        %v383 = vpop.xlane.xlu0 %382
        %384 = vadd.xlane.f32.xlu0 %v364
        %v385 = vpop.xlane.xlu0 %384
        %386 = vadd.xlane.f32.xlu0 %v365
        %v387 = vpop.xlane.xlu0 %386
        %388 = vadd.xlane.f32.xlu0 %v366
        %v389 = vpop.xlane.xlu0 %388
        %390 = vadd.xlane.f32.xlu0 %v367
        %v391 = vpop.xlane.xlu0 %390
        %392 = vadd.xlane.f32.xlu0 %v368
        %v393 = vpop.xlane.xlu0 %392
        %394 = vadd.xlane.f32.xlu0 %v369
        %v395 = vpop.xlane.xlu0 %394
        %396 = vadd.xlane.f32.xlu0 %v370
        %v397 = vpop.xlane.xlu0 %396
        %398 = vadd.xlane.f32.xlu0 %v371
        %v399 = vpop.xlane.xlu0 %398
        %400 = vadd.xlane.f32.xlu0 %v372
        %v401 = vpop.xlane.xlu0 %400
        %402 = vadd.xlane.f32.xlu0 %v373
        %v403 = vpop.xlane.xlu0 %402
        %404 = vadd.xlane.f32.xlu0 %v374
        %v405 = vpop.xlane.xlu0 %404
        %406 = vadd.xlane.f32.xlu0 %v375
        %v407 = vpop.xlane.xlu0 %406
        %v408 = vmax.f32 %v377, 1e-24
        %v409 = vmax.f32 %v379, 1e-24
        %v410 = vmax.f32 %v381, 1e-24
        %v411 = vmax.f32 %v383, 1e-24
        %v412 = vmax.f32 %v385, 1e-24
        %v413 = vmax.f32 %v387, 1e-24
        %v414 = vmax.f32 %v389, 1e-24
        %v415 = vmax.f32 %v391, 1e-24
        %v416 = vmax.f32 %v393, 1e-24
        %v417 = vmax.f32 %v395, 1e-24
        %v418 = vmax.f32 %v397, 1e-24
        %v419 = vmax.f32 %v399, 1e-24
        %v420 = vmax.f32 %v401, 1e-24
        %v421 = vmax.f32 %v403, 1e-24
        %v422 = vmax.f32 %v405, 1e-24
        %v423 = vmax.f32 %v407, 1e-24
        %v424 = vrsqrt.pop %v408
        %v425 = vrsqrt.pop %v409
        %v426 = vrsqrt.pop %v410
        %v427 = vrsqrt.pop %v411
        %v428 = vrsqrt.pop %v412
        %v429 = vrsqrt.pop %v413
        %v430 = vrsqrt.pop %v414
        %v431 = vrsqrt.pop %v415
        %v432 = vrsqrt.pop %v416
        %v433 = vrsqrt.pop %v417
        %v434 = vrsqrt.pop %v418
        %v435 = vrsqrt.pop %v419
        %v436 = vrsqrt.pop %v420
        %v437 = vrsqrt.pop %v421
        %v438 = vrsqrt.pop %v422
        %v439 = vrsqrt.pop %v423
        %v440 = vmul.f32 %v344, %v424
        %v441 = vmul.f32 %v345, %v425
        %v442 = vmul.f32 %v346, %v426
        %v443 = vmul.f32 %v347, %v427
        %v444 = vmul.f32 %v348, %v428
        %v445 = vmul.f32 %v349, %v429
        %v446 = vmul.f32 %v350, %v430
        %v447 = vmul.f32 %v351, %v431
        %v448 = vmul.f32 %v352, %v432
        %v449 = vmul.f32 %v353, %v433
        %v450 = vmul.f32 %v354, %v434
        %v451 = vmul.f32 %v355, %v435
        %v452 = vmul.f32 %v356, %v436
        %v453 = vmul.f32 %v357, %v437
        %v454 = vmul.f32 %v358, %v438
        %v455 = vmul.f32 %v359, %v439
        %v456 = vpack.c.bf16 %v441, %v440
        %v457 = vpack.c.bf16 %v443, %v442
        %v458 = vpack.c.bf16 %v445, %v444
        %v459 = vpack.c.bf16 %v447, %v446
        %v460 = vpack.c.bf16 %v449, %v448
        %v461 = vpack.c.bf16 %v451, %v450
        %v462 = vpack.c.bf16 %v453, %v452
        %v463 = vpack.c.bf16 %v455, %v454
        %v464 = vld [vmem:[#allocation2] sm:$0xf]
        %465 = vmatprep.subr.bf16.mxu0 0
        %466 = vmatpush1.bf16.xpose.msra.mxu0 %v463
        %467 = vmatprep.subr.bf16.mxu0 0
        %468 = vmatpush1.bf16.xpose.msra.mxu0 %v462
        %469 = vmatprep.subr.bf16.mxu0 0
        %470 = vmatpush1.bf16.xpose.msra.mxu0 %v461
        %471 = vmatprep.subr.bf16.mxu0 0
        %472 = vmatpush1.bf16.xpose.msra.mxu0 %v460
        %473 = vmatprep.subr.bf16.mxu0 0
        %474 = vmatpush1.bf16.xpose.msra.mxu0 %v459
        %475 = vmatprep.subr.bf16.mxu0 0
        %476 = vmatpush1.bf16.xpose.msra.mxu0 %v458
        %477 = vmatprep.subr.bf16.mxu0 0
        %478 = vmatpush1.bf16.xpose.msra.mxu0 %v457
        %479 = vmatprep.subr.bf16.mxu0 0
        %480 = vmatpush1.bf16.xpose.msra.mxu0 %v456
        %481 = vmatprep.subr.bf16.mxu0 0
        %482 = vmatpush2.bf16.xpose.msra.mxu0 0
        %483 = vmatprep.subr.bf16.mxu0 0
        %484 = vmatpush2.bf16.xpose.msra.mxu0 0
        %485 = vmatprep.subr.bf16.mxu0 0
        %486 = vmatpush2.bf16.xpose.msra.mxu0 0
        %487 = vmatprep.subr.bf16.mxu0 0
        %488 = vmatpush2.bf16.xpose.msra.mxu0 0
        %489 = vmatprep.subr.bf16.mxu0 0
        %490 = vmatpush2.bf16.xpose.msra.mxu0 0
        %491 = vmatprep.subr.bf16.mxu0 0
        %492 = vmatpush2.bf16.xpose.msra.mxu0 0
        %493 = vmatprep.subr.bf16.mxu0 0
        %494 = vmatpush2.bf16.xpose.msra.mxu0 0
        %495 = vmatprep.subr.bf16.mxu0 0
        %496 = vmatpush2.bf16.xpose.msra.mxu0 0
        %497 = vmatprep.mubr.bf16.mxu0 0
        %498 = vmatmul.mubr.bf16.gmra.mxu0 %v464
        %v499 = vpop.f32.mrf.mxu0
        %v500 = vadd.f32 0.0, %v499
        %v501 = vpop.f32.mrf.mxu0
        %v502 = vpop.f32.mrf.mxu0
        %v503 = vpop.f32.mrf.mxu0
        %504 = vdwg.mxu0
        %v505 = vsub.f32 %v500, 0.9553365
        %s506 = sld [smem:[#allocation3]]
        %v507 = vstv %s506
        %v508 = vadd.f32 %v505, %v507
        %v509 = vmax.f32 %v508, 0.0
        %vm510 = vcmp.ne.f32.partialorder %v508, %v508
        %v511 = vadd.f32 %v508, 0.0
        %v512 = vand.u32 2147483647, %v508
        %v513 = vsub.f32 0.0, %v512
        %v514 = vmul.f32 %v513, 1.442695
        %v515 = vpow.pop %v514
        %v516 = vadd.f32 %v515, 1.0
        %v517 = vlog2.pop %v516
        %v518 = vmul.f32 %v517, 0.6931472
        %v519 = vmul.f32 -0.5, %v515
        %v520 = vadd.f32 %v519, 1.0
        %v521 = vmul.f32 %v520, %v515
        %v522 = vand.u32 2147483647, %v515
        %vm523 = vcmp.lt.f32.partialorder %v522, 0.0004427343
        %v524 = vsel %vm523, %v521, %v518
        %v525 = vadd.f32 %v509, %v524
        %v526 = vsel %vm510, %v511, %v525
        %v527 = vsub.f32 %v526, %v508
        %v528 = vld [vmem:[%s322] sm:$0xff]
        %v529 = vld [vmem:[%s325] sm:$0x1]
        %530 = vset.pattern.permute.xlu0 0
        %531 = vperm.xlu0 %530, %v528
        %v532 = vpop.permute.xlu0 %531
        %v533 = vlaneseq
        %v534 = vshrl.u32 %v533, 7
        %v535 = vsub.s32 0, %v534
        %v536 = vrot.slane %v529, %v535
        %vm537 = vcmp.eq.s32.totalorder %v532, %v536
        %v538 = vsel %vm537, 1, 0
        %v539 = vcvt.s32.f32 %v538
        %v540 = vld [vmem:[#allocation8] sm:$0xff]
        %v541 = vmul.f32 %v527, %v539
        %v542 = vadd.f32 %v541, 0.0
        %v543 = vadd.f32 %v540, %v542
        %544 = vst [vmem:[#allocation8] sm:$0xff] %v543
        %s545 = scalar_lea.vmem [#allocation8], 8
        %v546 = vld [vmem:[%s545] sm:$0xff]
        %v547 = vadd.f32 %v539, 0.0
        %v548 = vadd.f32 %v546, %v547
        %549 = vst [vmem:[%s545] sm:$0xff] %v548
        %s550 = scalar_lea.vmem [#allocation8], 16
        %v551 = vld [vmem:[%s550] sm:$0xff]
        %v552 = vsub.f32 1.0, %v539
        %v553 = vmul.f32 %v526, %v552
        %v554 = vadd.f32 %v553, 0.0
        %v555 = vadd.f32 %v551, %v554
        %556 = vst [vmem:[%s550] sm:$0xff] %v555
        %s557 = sld [smem:[#allocation4]]
        %s558 = smul.u32 %s27, 8
        %s559 = sadd.s32 %s557, %s558
        %s560 = smul.u32 %s28, 128
        %s561 = sadd.s32 %s559, 8
        %p562 = scmp.lt.s32.totalorder %s560, %s561
        %s563 = sadd.s32 %s560, 128
        %p564 = scmp.lt.s32.totalorder %s559, %s563
        %p565 = pnand %p562, %p564
        %p566 = pneg %p565
        // Predicated region
        $region53: #{tpu_custom_call.1} parent=43 // pred_check
          _
        $region54: #{tpu_custom_call.1} parent=43 // pred_check_branch
          %568 = sbr.rel (%p565) target = $region56
        $region55: #{tpu_custom_call.1} parent=43 // pred_region
          %v569 = vlaneseq
          %v570 = vshrl.u32 %v569, 7
          %v571 = vlaneseq
          %v572 = vand.u32 %v571, 127
          %v573 = vstv %s560
          %v574 = vadd.s32 %v572, %v573
          %v575 = vstv %s559
          %v576 = vadd.s32 %v570, %v575
          %vm577 = vcmp.eq.s32.totalorder %v574, %v576
          %v578 = vsel %vm577, %v539, 0.0
          %v579 = vld [vmem:[#allocation8] sm:$0xff]
          %v580 = vmul.f32 %v527, %v578
          %v581 = vadd.f32 %v580, 0.0
          %v582 = vsub.f32 %v579, %v581
          %583 = vst [vmem:[#allocation8] sm:$0xff] %v582
          %v584 = vld [vmem:[%s545] sm:$0xff]
          %v585 = vadd.f32 %v578, 0.0
          %v586 = vsub.f32 %v584, %v585
          %587 = vst [vmem:[%s545] sm:$0xff] %v586
          %s588 = scalar_lea.vmem [#allocation8], 24
          %v589 = vld [vmem:[%s588] sm:$0xff]
          %v590 = vadd.f32 %v589, %v585
          %591 = vst [vmem:[%s588] sm:$0xff] %v590
        $region56: #{tpu_custom_call.1} parent=43 // pred_fallthru
          _
        // Predicated region
        $region57: #{tpu_custom_call.1} parent=43 // pred_check
          %p592 = pneg %p199
        $region58: #{tpu_custom_call.1} parent=43 // pred_check_branch
          %594 = sbr.rel (%p592) target = $region60
        $region59: #{tpu_custom_call.1} parent=43 // pred_region
          %s596 = ssub.s32 512, 512
          %597 = vsyncadd [#allocation7], %s596
          %s598 = smul.addr %s27, 4
          %s599 = smul.addr %s598, 128
          %s600 = scalar_lea.hbm %s6, %s599
          %s601 = sshll.u32 [#allocation8], 4
          %s602 = int_to_ptr.vmem [resolvable:$true] %s601
          %607 = dma.vmem_to_hbm [thread:$0]  %s602, 512, %s600, [#allocation7], 128, 128, 8
        $region60: #{tpu_custom_call.1} parent=43 // pred_fallthru
          _
        // Predicated region
        $region61: #{tpu_custom_call.1} parent=43 // pred_check
          %p608 = pneg %p199
        $region62: #{tpu_custom_call.1} parent=43 // pred_check_branch
          %610 = sbr.rel (%p608) target = $region64
        $region63: #{tpu_custom_call.1} parent=43 // pred_region
          %611 = dma.done [#allocation7], 512
        $region64: #{tpu_custom_call.1} parent=43 // pred_fallthru
          _
      $region44: #{tpu_custom_call.1} parent=5 // pred_fallthru
        _
      %p612 = scmp.le.s32.totalorder 2, %s18
      // Predicated region
      $region65: #{tpu_custom_call.1} parent=5 // pred_check
        %p613 = pneg %p612
      $region66: #{tpu_custom_call.1} parent=5 // pred_check_branch
        %615 = sbr.rel (%p613) target = $region68
      $region67: #{tpu_custom_call.1} parent=5 // pred_region
        %s616 = ssub.s32 %s18, 2
      $region68: #{tpu_custom_call.1} parent=5 // pred_fallthru
        _
    $region6: #{tpu_custom_call.1} parent=1 // loop_footer
      %s22 = sadd.s32 1, %s18
    $region7: #{tpu_custom_call.1} parent=1 // loop_footer_branch
      %17 = sbr.rel target = $region3
    $region8: #{tpu_custom_call.1} parent=1 // loop_exit
      _
    %617 = vsyncpa [#allocation6], 1
    %s618 = scalar_lea.sflag [#allocation6], 1
    %619 = vsyncpa %s618, 1
    %620 = vsyncpa [#allocation7], 1
    %s621 = scalar_lea.sflag [#allocation7], 1
    %622 = vsyncpa %s621, 1

</llo_original>
